<compile_context>
chip_gen: v6e
topology: v6e:2x2x1
jax: 0.10.0
libtpu: 0.0.40
codegen_flags: <defaults>
</compile_context>

<pallas_src>
import functools

import jax
import jax.numpy as jnp
from jax.experimental import pallas as pl
from jax.experimental.pallas import tpu as pltpu


def _layernorm_kernel(x_ref, alpha_ref, bias_ref, o_ref, *, eps, n_feat):
    """Normalize each row of a (row_tile, H) tile over its H features.

    The trailing grid block may be partial along rows: out-of-bounds rows hold
    garbage, but statistics are strictly per-row and their outputs are masked
    on store, so they never affect valid rows.  Do NOT add cross-row
    reductions to this kernel without re-introducing row masking.
    """
    x = x_ref[...].astype(jnp.float32)                   # (T, H)
    n = jnp.float32(n_feat)

    # Two-pass statistics (numerically safer than sum/sum-sq; data is already
    # resident in VMEM so the second pass costs no extra HBM traffic).
    mean = jnp.sum(x, axis=-1, keepdims=True) / n        # (T, 1)
    diff = x - mean
    # Unbiased variance (Bessel, N-1) to match torch.Tensor.std default.
    # n_feat == 1 divides by zero (NaN) exactly like the torch module would.
    var = jnp.sum(diff * diff, axis=-1, keepdims=True) / jnp.float32(n_feat - 1)
    std = jnp.sqrt(var)

    # Per-row reciprocal on a (T,1) column instead of a full (T,H) divide.
    inv = pl.reciprocal(std + jnp.float32(eps), approx=False)

    y = diff * inv * alpha_ref[...] + bias_ref[...]
    o_ref[...] = y.astype(o_ref.dtype)


def _cdiv(a, b):
    return -(-a // b)


def _round_up(v, m):
    return _cdiv(v, m) * m


def _vmem_capacity_bytes():
    try:
        cap = int(pltpu.get_tpu_info().vmem_capacity_bytes)
        if cap > 0:
            return cap
    except Exception:
        pass
    return 64 << 20  # conservative fallback (v7x per-TensorCore VMEM)


def _choose_row_tile(n_rows, h, elem_bytes, vmem_budget_bytes):
    """Rows per grid step: ~2 MiB x blocks, VMEM-bounded, >= 8 steps if possible."""
    row_bytes = max(h * elem_bytes, 1)
    # Target ~2 MiB of x per block: measured tiled-f32 data puts this at ~86%+
    # of the HBM roofline, well past the ~0.35 us/step overhead regime.
    tile = (2 << 20) // row_bytes
    # VMEM footprint per row: double-buffered in + out blocks plus ~5 f32
    # full-width temporaries the compiler may materialize (upcast, diff,
    # product, scaled, pre-cast y).
    tile = min(tile, vmem_budget_bytes // max(h * (4 * elem_bytes + 5 * 4), 1))
    tile = max(8, (tile // 8) * 8)
    # No point exceeding the (8-rounded) row count.
    tile = min(tile, _round_up(n_rows, 8))
    # Prefer >= 8 grid steps (>= 4 per TensorCore on v7x) so both cores get
    # several blocks and each keeps its DMA pipeline full -- but don't shrink
    # blocks below ~512 KiB, which would just expose per-step overhead.
    min_bw_tile = max(8, ((512 << 10) // row_bytes) // 8 * 8)
    if _cdiv(n_rows, tile) < 8:
        per_step = max(8, _round_up(_cdiv(n_rows, 8), 8))
        tile = min(tile, max(per_step, min_bw_tile))
    return max(8, tile)


def layer_normalization(x, alpha, bias, eps=1e-6):
    """x: (..., H); alpha, bias: (H,). Returns same shape/dtype as x."""
    orig_shape = x.shape
    h = orig_shape[-1]
    x2 = x.reshape(-1, h)
    n_rows = x2.shape[0]

    elem_bytes = jnp.dtype(x.dtype).itemsize
    vmem_cap = _vmem_capacity_bytes()
    # Budget for tile selection: about half the physical VMEM, <= 48 MiB.
    tile_budget = min(vmem_cap // 2, 48 << 20)
    row_tile = _choose_row_tile(n_rows, h, elem_bytes, tile_budget)

    # Scoped-VMEM limit sized from the actual footprint (with 2x slack),
    # capped so we don't starve surrounding fusions (esp. on v5e) and never
    # above 3/4 of the physical capacity (v7x has only 64 MiB).
    footprint = row_tile * h * (4 * elem_bytes + 5 * 4) + 4 * h * 4
    vmem_limit = int(min(max(2 * footprint, 16 << 20), vmem_cap * 3 // 4, 64 << 20))

    # Hoist parameter casts / layout out of the per-tile hot path.
    alpha2 = alpha.astype(jnp.float32).reshape(1, h)
    bias2 = bias.astype(jnp.float32).reshape(1, h)

    grid = (_cdiv(n_rows, row_tile),)

    out = pl.pallas_call(
        functools.partial(_layernorm_kernel, eps=eps, n_feat=h),
        out_shape=jax.ShapeDtypeStruct((n_rows, h), x.dtype),
        grid_spec=pl.GridSpec(
            grid=grid,
            in_specs=[
                # Last block dim == full H: exempt from the 128-divisibility
                # rule; Mosaic masks the lane padding in-VMEM.
                pl.BlockSpec((row_tile, h), lambda i: (i, 0)),
                pl.BlockSpec((1, h), lambda i: (0, 0)),
                pl.BlockSpec((1, h), lambda i: (0, 0)),
            ],
            out_specs=pl.BlockSpec((row_tile, h), lambda i: (i, 0)),
        ),
        compiler_params=pltpu.CompilerParams(
            dimension_semantics=("parallel",),
            vmem_limit_bytes=vmem_limit,
        ),
    )(x2, alpha2, bias2)

    return out.reshape(orig_shape)


if __name__ == "__main__":
    key = jax.random.PRNGKey(0)
    batch, seq, hidden = 2, 8, 32
    x = jax.random.normal(key, (batch, seq, hidden), dtype=jnp.float32)

    # deterministic parameter init matching nn.Parameter(torch.ones/zeros(features))
    alpha = jnp.ones((hidden,), dtype=jnp.float32)
    bias = jnp.zeros((hidden,), dtype=jnp.float32)

    y = layer_normalization(x, alpha, bias, eps=1e-6)
    jax.block_until_ready(y)

    # reference check in plain JAX (unbiased std, eps on std — same as torch module)
    mean = jnp.mean(x, axis=-1, keepdims=True)
    std = jnp.std(x, axis=-1, keepdims=True, ddof=1)
    y_ref = alpha * (x - mean) / (std + 1e-6) + bias
    assert jnp.allclose(y, y_ref, atol=1e-5, rtol=1e-5), float(
        jnp.max(jnp.abs(y - y_ref)))

    print("KERNEL_OK")
</pallas_src>

<mosaic_0001>
module attributes {stable_mosaic.version = 11 : i64} {
  func.func @_layernorm_kernel(%arg0: i32, %arg1: memref<16x32xf32, #tpu.memory_space<vmem>>, %arg2: memref<1x32xf32, #tpu.memory_space<vmem>>, %arg3: memref<1x32xf32, #tpu.memory_space<vmem>>, %arg4: memref<16x32xf32, #tpu.memory_space<vmem>>) attributes {dimension_semantics = [#tpu.dimension_semantics<parallel>], iteration_bounds = array<i64: 1>, scalar_prefetch = 0 : i64, scratch_operands = 0 : i64, tpu.core_type = #tpu.core_type<tc>, window_params = [{transform_indices = @transform_0, window_bounds = array<i64: 16, 32>}, {pipeline_mode = #tpu.pipeline_mode<synchronous>, transform_indices = @transform_1, window_bounds = array<i64: 1, 32>}, {pipeline_mode = #tpu.pipeline_mode<synchronous>, transform_indices = @transform_2, window_bounds = array<i64: 1, 32>}, {transform_indices = @transform_3, window_bounds = array<i64: 16, 32>}]} {
    %c0 = arith.constant 0 : index
    %c0_0 = arith.constant 0 : index
    %0 = vector.load %arg1[%c0, %c0_0] : memref<16x32xf32, #tpu.memory_space<vmem>>, vector<16x32xf32>
    %cst = arith.constant dense<0.000000e+00> : vector<16xf32>
    %1 = vector.multi_reduction <add>, %0, %cst [1] : vector<16x32xf32> to vector<16xf32>
    %2 = vector.shape_cast %1 : vector<16xf32> to vector<16x1xf32>
    %cst_1 = arith.constant 3.200000e+01 : f32
    %3 = vector.broadcast %cst_1 : f32 to vector<16x1xf32>
    %4 = arith.divf %2, %3 : vector<16x1xf32>
    %5 = vector.broadcast %4 : vector<16x1xf32> to vector<16x32xf32>
    %6 = arith.subf %0, %5 : vector<16x32xf32>
    %7 = arith.mulf %6, %6 : vector<16x32xf32>
    %cst_2 = arith.constant dense<0.000000e+00> : vector<16xf32>
    %8 = vector.multi_reduction <add>, %7, %cst_2 [1] : vector<16x32xf32> to vector<16xf32>
    %9 = vector.shape_cast %8 : vector<16xf32> to vector<16x1xf32>
    %cst_3 = arith.constant 3.100000e+01 : f32
    %10 = vector.broadcast %cst_3 : f32 to vector<16x1xf32>
    %11 = arith.divf %9, %10 : vector<16x1xf32>
    %12 = math.sqrt %11 : vector<16x1xf32>
    %cst_4 = arith.constant 9.99999997E-7 : f32
    %13 = vector.broadcast %cst_4 : f32 to vector<16x1xf32>
    %14 = arith.addf %12, %13 : vector<16x1xf32>
    %15 = tpu.reciprocal %14 : vector<16x1xf32> -> vector<16x1xf32>
    %16 = vector.broadcast %15 : vector<16x1xf32> to vector<16x32xf32>
    %17 = arith.mulf %6, %16 : vector<16x32xf32>
    %c0_5 = arith.constant 0 : index
    %c0_6 = arith.constant 0 : index
    %18 = vector.load %arg2[%c0_5, %c0_6] : memref<1x32xf32, #tpu.memory_space<vmem>>, vector<1x32xf32>
    %19 = vector.broadcast %18 : vector<1x32xf32> to vector<16x32xf32>
    %20 = arith.mulf %17, %19 : vector<16x32xf32>
    %c0_7 = arith.constant 0 : index
    %c0_8 = arith.constant 0 : index
    %21 = vector.load %arg3[%c0_7, %c0_8] : memref<1x32xf32, #tpu.memory_space<vmem>>, vector<1x32xf32>
    %22 = vector.broadcast %21 : vector<1x32xf32> to vector<16x32xf32>
    %23 = arith.addf %20, %22 : vector<16x32xf32>
    %c0_9 = arith.constant 0 : index
    %c0_10 = arith.constant 0 : index
    %24 = vector.load %arg4[%c0_9, %c0_10] : memref<16x32xf32, #tpu.memory_space<vmem>>, vector<16x32xf32>
    tpu.vector_store %arg4[%c0_9, %c0_10], %23 {strides = array<i32>} : memref<16x32xf32, #tpu.memory_space<vmem>>, vector<16x32xf32>,
    return
  }
  func.func @transform_0(%arg0: i32) -> (i32, i32) {
    %c0_i32 = arith.constant 0 : i32
    %c0_i32_0 = arith.constant 0 : i32
    return %arg0, %c0_i32 : i32, i32
  }
  func.func @transform_1(%arg0: i32) -> (i32, i32) {
    %c0_i32 = arith.constant 0 : i32
    %c0_i32_0 = arith.constant 0 : i32
    %c0_i32_1 = arith.constant 0 : i32
    return %c0_i32, %c0_i32_0 : i32, i32
  }
  func.func @transform_2(%arg0: i32) -> (i32, i32) {
    %c0_i32 = arith.constant 0 : i32
    %c0_i32_0 = arith.constant 0 : i32
    %c0_i32_1 = arith.constant 0 : i32
    return %c0_i32, %c0_i32_0 : i32, i32
  }
  func.func @transform_3(%arg0: i32) -> (i32, i32) {
    %c0_i32 = arith.constant 0 : i32
    %c0_i32_0 = arith.constant 0 : i32
    return %arg0, %c0_i32 : i32, i32
  }
}

</mosaic_0001>

<llo_original>
// kernel: tpu_custom_call.1
$region0: #{tpu_custom_call.1}
  #allocation0 [shape = 'u32[]', space=smem, size = 0x4, offset = 0x4, fixed_abs, tag = 'smem constant byte address 0x4 - core index']
  #allocation1 [shape = 'u32[144,128]{1,0:T(1,128)}', space=vmem, size = 0x12000, scoped, tag = 'internal scratch']
  %s0 = inlined_call_operand.hbm [shape: f32[16,32], index: 0, kind: input, shape index: {}]
  %s1 = inlined_call_operand.vmem [shape: f32[1,32], index: 1, kind: input, shape index: {}]
  %s2 = inlined_call_operand.vmem [shape: f32[1,32], index: 2, kind: input, shape index: {}]
  %s3 = inlined_call_operand.hbm [shape: f32[16,32], index: 3, kind: output, shape index: {}]
  %s4 = sld [smem:[#allocation0]]
  $region26: #{tpu_custom_call.1} parent=0
    _
  %s6 = ssub.s32 1, %s4
  %s7 = scalar_select 0, %s6, %s4
  $region1: #{tpu_custom_call.1} parent=0
    #allocation2 [shape = 'u8[8192]{0}', space=vmem, size = 0x2000, scoped, tag = 'input window, operand 0, single buffered']
    #allocation3 [shape = 's32[1]{0}', space=sflag, size = 0x4, scoped, tag = 'scoped memory for tpu_custom_call.1']
    #allocation4 [shape = 's32[1]{0}', space=sflag, size = 0x4, scoped, tag = 'scoped memory for tpu_custom_call.1']
    #allocation5 [shape = 'u8[8192]{0}', space=vmem, size = 0x2000, scoped, tag = 'output window, operand 0, single buffered']
    %8 = vsyncpa [#allocation3], 0
    %9 = vsyncpa [#allocation4], 0
    // Predicated region
    $region2: #{tpu_custom_call.1} parent=1 // pred_check
      _
    $region3: #{tpu_custom_call.1} parent=1 // pred_check_branch
      %11 = sbr.rel (0) target = $region5
    $region4: #{tpu_custom_call.1} parent=1 // pred_region
      %s13 = ssub.s32 256, 256
      %14 = vsyncadd [#allocation3], %s13
      %s15 = sshll.u32 [#allocation2], 4
      %s16 = int_to_ptr.vmem [resolvable:$true] %s15
      %21 = dma.hbm_to_vmem [thread:$0]  %s0, 256, %s16, [#allocation3], 128, 128, 8
    $region5: #{tpu_custom_call.1} parent=1 // pred_fallthru
      _
    // Predicated region
    $region6: #{tpu_custom_call.1} parent=1 // pred_check
      _
    $region7: #{tpu_custom_call.1} parent=1 // pred_check_branch
      %23 = sbr.rel (0) target = $region9
    $region8: #{tpu_custom_call.1} parent=1 // pred_region
      _
    $region9: #{tpu_custom_call.1} parent=1 // pred_fallthru
      _
    // Predicated region
    $region10: #{tpu_custom_call.1} parent=1 // pred_check
      _
    $region11: #{tpu_custom_call.1} parent=1 // pred_check_branch
      %25 = sbr.rel (0) target = $region13
    $region12: #{tpu_custom_call.1} parent=1 // pred_region
      _
    $region13: #{tpu_custom_call.1} parent=1 // pred_fallthru
      _
    // Predicated region
    $region14: #{tpu_custom_call.1} parent=1 // pred_check
      _
    $region15: #{tpu_custom_call.1} parent=1 // pred_check_branch
      %27 = sbr.rel (0) target = $region17
    $region16: #{tpu_custom_call.1} parent=1 // pred_region
      %28 = dma.done [#allocation3], 256
    $region17: #{tpu_custom_call.1} parent=1 // pred_fallthru
      _
    %v29 = vld [vmem:[#allocation2] sm:$0xff]
    %v30 = vld [vmem:[#allocation2 + $0x8] sm:$0xff]
    %vm31 = vcmask 261120
    %v32 = vsel %vm31, %v29, 0.0
    %33 = vadd.xlane.f32.xlu0 %v32
    %v34 = vpop.xlane.xlu0 %33
    %v35 = vsel %vm31, %v30, 0.0
    %36 = vadd.xlane.f32.xlu0 %v35
    %v37 = vpop.xlane.xlu0 %36
    %v38 = vrcp.pop 32.0
    %v39 = vmul.f32 %v34, %v38
    %v40 = vmul.f32 %v37, %v38
    %v41 = vsub.f32 %v29, %v39
    %v42 = vsub.f32 %v30, %v40
    %v43 = vmul.f32 %v41, %v41
    %v44 = vmul.f32 %v42, %v42
    %v45 = vsel %vm31, %v43, 0.0
    %46 = vadd.xlane.f32.xlu0 %v45
    %v47 = vpop.xlane.xlu0 %46
    %v48 = vsel %vm31, %v44, 0.0
    %49 = vadd.xlane.f32.xlu0 %v48
    %v50 = vpop.xlane.xlu0 %49
    %v51 = vrcp.pop 31.0
    %v52 = vmul.f32 %v47, %v51
    %v53 = vmul.f32 %v50, %v51
    %v54 = vrsqrt.pop %v52
    %v55 = vmul.f32 %v52, %v54
    %vm56 = vcmp.eq.f32.partialorder %v52, inf
    %v57 = vsel %vm56, %v52, %v55
    %vm58 = vcmp.eq.f32.partialorder %v52, 0.0
    %v59 = vand.u32 %v52, 2147483648
    %v60 = vsel %vm58, %v59, %v57
    %v61 = vrsqrt.pop %v53
    %v62 = vmul.f32 %v53, %v61
    %vm63 = vcmp.eq.f32.partialorder %v53, inf
    %v64 = vsel %vm63, %v53, %v62
    %vm65 = vcmp.eq.f32.partialorder %v53, 0.0
    %v66 = vand.u32 %v53, 2147483648
    %v67 = vsel %vm65, %v66, %v64
    %v68 = vadd.f32 %v60, 1e-06
    %v69 = vadd.f32 %v67, 1e-06
    %v70 = vrcp.pop %v68
    %v71 = vrcp.pop %v69
    %v72 = vmul.f32 %v41, %v70
    %v73 = vmul.f32 %v42, %v71
    %v74 = vld [vmem:[%s1] sm:$0x1]
    %v76 = vlaneseq
    %v77 = vshrl.u32 %v76, 7
    %v78 = vsub.s32 0, %v77
    %v79 = vrot.slane %v74, %v78
    %v81 = vmul.f32 %v72, %v79
    %v82 = vmul.f32 %v73, %v79
    %v83 = vld [vmem:[%s2] sm:$0x1]
    %v85 = vlaneseq
    %v86 = vshrl.u32 %v85, 7
    %v87 = vsub.s32 0, %v86
    %v88 = vrot.slane %v83, %v87
    %v90 = vadd.f32 %v81, %v88
    %v91 = vadd.f32 %v82, %v88
    %92 = vst.msk [vmem:[#allocation5] sm:$0xff] %vm31, %v90
    %93 = vst.msk [vmem:[#allocation5 + $0x8] sm:$0xff] %vm31, %v91
    // Predicated region
    $region18: #{tpu_custom_call.1} parent=1 // pred_check
      _
    $region19: #{tpu_custom_call.1} parent=1 // pred_check_branch
      %95 = sbr.rel (0) target = $region21
    $region20: #{tpu_custom_call.1} parent=1 // pred_region
      %s97 = ssub.s32 256, 256
      %98 = vsyncadd [#allocation4], %s97
      %s99 = sshll.u32 [#allocation5], 4
      %s100 = int_to_ptr.vmem [resolvable:$true] %s99
      %105 = dma.vmem_to_hbm [thread:$0]  %s100, 256, %s3, [#allocation4], 128, 128, 8
    $region21: #{tpu_custom_call.1} parent=1 // pred_fallthru
      _
    // Predicated region
    $region22: #{tpu_custom_call.1} parent=1 // pred_check
      _
    $region23: #{tpu_custom_call.1} parent=1 // pred_check_branch
      %107 = sbr.rel (0) target = $region25
    $region24: #{tpu_custom_call.1} parent=1 // pred_region
      %108 = dma.done [#allocation4], 256
    $region25: #{tpu_custom_call.1} parent=1 // pred_fallthru
      _
    %109 = vsyncpa [#allocation3], 1
    %110 = vsyncpa [#allocation4], 1

</llo_original>
